<compile_context>
chip_gen: v7x
topology: tpu7x:2x2x1
jax: 0.10.0
libtpu: 0.0.40
codegen_flags: <defaults>
</compile_context>

<pallas_src>
import math

import jax
import jax.numpy as jnp
from jax import lax
from jax.experimental import pallas as pl
from jax.experimental.pallas import tpu as pltpu


def lstmrnn_kernel(xt_ref, p_ref, wf_ref, bf_ref, out_ref):
    # xt_ref : (L, Bt)  f32, VMEM — x transposed so batch sits on lanes
    # p_ref  : (8,)     f32, SMEM: [wq, bq, wk, bk, wv, bv, w_out, b_out] (embed_dim == 1)
    # wf_ref : (O, L)   fused Linear weight  Wf = W2 @ W1  (f32)
    # bf_ref : (O, 1)   fused Linear bias    bf = W2 @ b1 + b2  (f32)
    # out_ref: (O, Bt)  output, batch lane-dense
    xt = xt_ref[...].astype(jnp.float32)                    # (L, Bt)

    wq, bq = p_ref[0], p_ref[1]
    wk, bk = p_ref[2], p_ref[3]
    wv, bv = p_ref[4], p_ref[5]
    wo, bo = p_ref[6], p_ref[7]

    # in-projection: embed_dim = 1 -> scalar affine; softmax scale = 1/sqrt(1) = 1 (no-op).
    q = xt * wq + bq                                        # (L, Bt)  q[i, b]
    k = xt * wk + bk                                        # (L, Bt)  k[j, b]
    v = xt * wv + bv                                        # (L, Bt)  v[j, b]

    # Exact row-max of the score matrix without touching any (L, L, Bt) tensor:
    # max_j q[i]*k[j] = q[i]*kmax if q[i] >= 0 else q[i]*kmin.
    kmax = jnp.max(k, axis=0, keepdims=True)                # (1, Bt)
    kmin = jnp.min(k, axis=0, keepdims=True)                # (1, Bt)
    m = q * jnp.where(q >= 0.0, kmax, kmin)                 # (L, Bt)

    # Scores s[j, i, b] = k[j, b] * q[i, b]; softmax over j with the normalization folded
    # into the reduction. Batch is the lane axis of every temporary -> lane-dense exp.
    e = jnp.exp(k[:, None, :] * q[None, :, :] - m[None, :, :])     # (L, L, Bt)
    den = jnp.sum(e, axis=0)                                       # (L, Bt)
    num = jnp.sum(e * v[:, None, :], axis=0)                       # (L, Bt)

    inv = pl.reciprocal(den, approx=True)                   # EUP slot
    inv = inv * (2.0 - den * inv)                           # one Newton step -> ~f32 accuracy
    attn = (num * inv) * wo + bo                            # (L, Bt): softmax(S) @ v, out_proj

    # Fused Linear(L, H) -> Linear(H, O): (O, L) x (L, Bt) -> (O, Bt); MXU is otherwise idle.
    out = jnp.dot(wf_ref[...], attn, preferred_element_type=jnp.float32) + bf_ref[...]
    out_ref[...] = out.astype(out_ref.dtype)


def prepare_params(mha_in_w, mha_in_b, mha_out_w, mha_out_b, w1, b1, w2, b2):
    """One-time packing + algebraic fusion of the two Linear layers (all in f32)."""
    H, L = w1.shape
    O = w2.shape[0]
    scalars = jnp.stack([
        mha_in_w[0, 0], mha_in_b[0],       # wq, bq
        mha_in_w[1, 0], mha_in_b[1],       # wk, bk
        mha_in_w[2, 0], mha_in_b[2],       # wv, bv
        mha_out_w[0, 0], mha_out_b[0],     # w_out, b_out
    ]).astype(jnp.float32)                 # (8,)
    w1f = w1.astype(jnp.float32)
    w2f = w2.astype(jnp.float32)
    wf = w2f @ w1f                                          # (O, L)
    bf = w2f @ b1.astype(jnp.float32) + b2.astype(jnp.float32)   # (O,)
    return scalars, wf, bf.reshape(O, 1)


def _batch_tile(B, L, budget_bytes=4 << 20):
    """Lane-aligned batch tile whose live f32 temporaries fit `budget_bytes`.

    Counts ~4 simultaneously-live (L, L, Bt) score temporaries plus ~12 (L, Bt) vectors.
    The 4 MiB default keeps the per-step working set (incl. double-buffered x / out tiles)
    well inside v5e's 16 MiB default scoped VMEM and v7x's 64 MiB per-TC physical VMEM.
    """
    if B <= 128:
        return B                                           # tiny / demo batches: one tile
    per_elem = 4 * (4 * L * L + 12 * L)                    # bytes of live f32 temps per elem
    cap = max(128, (budget_bytes // per_elem) // 128 * 128)
    # Guarantee >= 2 grid steps for larger batches so both v7x TensorCores get work.
    half = max(128, (B // 2) // 128 * 128)
    return min(cap, half)


def lstmrnn_forward(x, params):
    scalars, wf, bf = params
    s0, B, L = x.shape
    assert s0 == 1, "the PyTorch forward implies a leading dim of 1"
    O = wf.shape[0]

    bt = _batch_tile(B, L)
    grid_n = pl.cdiv(B, bt)
    b_pad = grid_n * bt

    # Batch-minor layout for the kernel: (1, B, L) -> (L, B); pad batch to the tile grid.
    xt = jnp.swapaxes(x[0], 0, 1)                           # (L, B)
    if b_pad != B:
        xt = jnp.pad(xt, ((0, 0), (0, b_pad - B)))          # zero rows are harmless & sliced off

    out_t = pl.pallas_call(
        lstmrnn_kernel,
        grid=(grid_n,),
        out_shape=jax.ShapeDtypeStruct((O, b_pad), jnp.float32),
        in_specs=[
            pl.BlockSpec((L, bt), lambda i: (0, i)),           # x^T tile, batch on lanes
            pl.BlockSpec(memory_space=pltpu.MemorySpace.SMEM), # 8 packed MHA scalars
            pl.BlockSpec((O, L), lambda i: (0, 0)),            # fused weight (fetched once)
            pl.BlockSpec((O, 1), lambda i: (0, 0)),            # fused bias
        ],
        out_specs=pl.BlockSpec((O, bt), lambda i: (0, i)),     # lane-dense over batch
        compiler_params=pltpu.CompilerParams(
            dimension_semantics=("parallel",)),                # both TCs on v7x when grid >= 2
    )(xt, scalars, wf, bf)

    # (O, B_pad) -> (1, B, O); for the module default O == 1 this is a cheap reshape.
    return out_t[:, :B].T.reshape(1, B, O)


def reference(x, mha_in_w, mha_in_b, mha_out_w, mha_out_b, w1, b1, w2, b2):
    """Pure-JAX mirror of the PyTorch forward, for correctness checking."""
    x2 = x[0]                                              # (B, L)
    q = x2 * mha_in_w[0, 0] + mha_in_b[0]
    k = x2 * mha_in_w[1, 0] + mha_in_b[1]
    v = x2 * mha_in_w[2, 0] + mha_in_b[2]
    s = q[:, :, None] * k[:, None, :]
    a = jax.nn.softmax(s, axis=-1)
    ao = jnp.einsum('bij,bj->bi', a, v)
    attn = ao * mha_out_w[0, 0] + mha_out_b[0]
    h = attn @ w1.T + b1
    out = h @ w2.T + b2
    return out.reshape(1, x.shape[1], -1)


if __name__ == "__main__":
    # Small shapes implied by the forward pass.
    B = 8            # batch
    L = 16           # input_size (acts as the attention sequence length)
    H = 32           # hidden_size
    O = 1            # output_size

    key = jax.random.PRNGKey(0)
    keys = jax.random.split(key, 10)

    x = jax.random.normal(keys[0], (1, B, L), dtype=jnp.float32)

    # nn.MultiheadAttention(1, 1) parameters: in_proj (3,1)+(3,), out_proj (1,1)+(1,)
    mha_in_w = jax.random.normal(keys[1], (3, 1), dtype=jnp.float32) * 0.5
    mha_in_b = jax.random.normal(keys[2], (3,), dtype=jnp.float32) * 0.1
    mha_out_w = jax.random.normal(keys[3], (1, 1), dtype=jnp.float32) * 0.5
    mha_out_b = jax.random.normal(keys[4], (1,), dtype=jnp.float32) * 0.1

    # Linear(L, H) and Linear(H, O)
    w1 = jax.random.normal(keys[5], (H, L), dtype=jnp.float32) / math.sqrt(L)
    b1 = jax.random.normal(keys[6], (H,), dtype=jnp.float32) * 0.1
    w2 = jax.random.normal(keys[7], (O, H), dtype=jnp.float32) / math.sqrt(H)
    b2 = jax.random.normal(keys[8], (O,), dtype=jnp.float32) * 0.1

    params = prepare_params(mha_in_w, mha_in_b, mha_out_w, mha_out_b, w1, b1, w2, b2)
    fwd = jax.jit(lstmrnn_forward)

    # Small-batch (single tile) path.
    y_ref = reference(x, mha_in_w, mha_in_b, mha_out_w, mha_out_b, w1, b1, w2, b2)
    y = jax.block_until_ready(fwd(x, params))
    assert y.shape == (1, B, O), y.shape
    assert jnp.allclose(y, y_ref, atol=1e-3, rtol=1e-3), "small-batch mismatch vs reference"

    # Larger non-multiple-of-128 batch: exercises cdiv grid, zero padding, multi-step
    # "parallel" grid (v7x megacore) and lane-dense 128-wide tiles.
    B2 = 300
    x2 = jax.random.normal(keys[9], (1, B2, L), dtype=jnp.float32)
    y2_ref = reference(x2, mha_in_w, mha_in_b, mha_out_w, mha_out_b, w1, b1, w2, b2)
    y2 = jax.block_until_ready(fwd(x2, params))
    assert y2.shape == (1, B2, O), y2.shape
    assert jnp.allclose(y2, y2_ref, atol=1e-3, rtol=1e-3), "tiled-batch mismatch vs reference"

    print("KERNEL_OK")
</pallas_src>

<mosaic_0001>
module attributes {stable_mosaic.version = 11 : i64} {
  func.func @lstmrnn_kernel(%arg0: i32, %arg1: memref<16x8xf32, #tpu.memory_space<vmem>>, %arg2: memref<8xf32, #tpu.memory_space<smem>>, %arg3: memref<1x16xf32, #tpu.memory_space<vmem>>, %arg4: memref<1x1xf32, #tpu.memory_space<vmem>>, %arg5: memref<1x8xf32, #tpu.memory_space<vmem>>) attributes {dimension_semantics = [#tpu.dimension_semantics<parallel>], iteration_bounds = array<i64: 1>, scalar_prefetch = 0 : i64, scratch_operands = 0 : i64, tpu.core_type = #tpu.core_type<tc>, window_params = [{transform_indices = @transform_0, window_bounds = array<i64: 16, 8>}, {transform_indices = @transform_1, window_bounds = array<i64: 8>}, {pipeline_mode = #tpu.pipeline_mode<synchronous>, transform_indices = @transform_2, window_bounds = array<i64: 1, 16>}, {pipeline_mode = #tpu.pipeline_mode<synchronous>, transform_indices = @transform_3, window_bounds = array<i64: 1, 1>}, {transform_indices = @transform_4, window_bounds = array<i64: 1, 8>}]} {
    %c0 = arith.constant 0 : index
    %c0_0 = arith.constant 0 : index
    %0 = vector.load %arg1[%c0, %c0_0] : memref<16x8xf32, #tpu.memory_space<vmem>>, vector<16x8xf32>
    %c0_1 = arith.constant 0 : index
    %1 = memref.load %arg2[%c0_1] : memref<8xf32, #tpu.memory_space<smem>>
    %c1 = arith.constant 1 : index
    %2 = memref.load %arg2[%c1] : memref<8xf32, #tpu.memory_space<smem>>
    %c2 = arith.constant 2 : index
    %3 = memref.load %arg2[%c2] : memref<8xf32, #tpu.memory_space<smem>>
    %c3 = arith.constant 3 : index
    %4 = memref.load %arg2[%c3] : memref<8xf32, #tpu.memory_space<smem>>
    %c4 = arith.constant 4 : index
    %5 = memref.load %arg2[%c4] : memref<8xf32, #tpu.memory_space<smem>>
    %c5 = arith.constant 5 : index
    %6 = memref.load %arg2[%c5] : memref<8xf32, #tpu.memory_space<smem>>
    %c6 = arith.constant 6 : index
    %7 = memref.load %arg2[%c6] : memref<8xf32, #tpu.memory_space<smem>>
    %c7 = arith.constant 7 : index
    %8 = memref.load %arg2[%c7] : memref<8xf32, #tpu.memory_space<smem>>
    %9 = vector.broadcast %1 : f32 to vector<16x8xf32>
    %10 = arith.mulf %0, %9 : vector<16x8xf32>
    %11 = vector.broadcast %2 : f32 to vector<16x8xf32>
    %12 = arith.addf %10, %11 : vector<16x8xf32>
    %13 = vector.broadcast %3 : f32 to vector<16x8xf32>
    %14 = arith.mulf %0, %13 : vector<16x8xf32>
    %15 = vector.broadcast %4 : f32 to vector<16x8xf32>
    %16 = arith.addf %14, %15 : vector<16x8xf32>
    %17 = vector.broadcast %5 : f32 to vector<16x8xf32>
    %18 = arith.mulf %0, %17 : vector<16x8xf32>
    %19 = vector.broadcast %6 : f32 to vector<16x8xf32>
    %20 = arith.addf %18, %19 : vector<16x8xf32>
    %cst = arith.constant dense<0xFF800000> : vector<8xf32>
    %21 = vector.multi_reduction <maximumf>, %16, %cst [0] : vector<16x8xf32> to vector<8xf32>
    %22 = vector.shape_cast %21 : vector<8xf32> to vector<1x8xf32>
    %cst_2 = arith.constant dense<0x7F800000> : vector<8xf32>
    %23 = vector.multi_reduction <minimumf>, %16, %cst_2 [0] : vector<16x8xf32> to vector<8xf32>
    %24 = vector.shape_cast %23 : vector<8xf32> to vector<1x8xf32>
    %cst_3 = arith.constant 0.000000e+00 : f32
    %25 = vector.broadcast %cst_3 : f32 to vector<16x8xf32>
    %26 = arith.cmpf oge, %12, %25 : vector<16x8xf32>
    %27 = vector.shape_cast %22 : vector<1x8xf32> to vector<1x8xf32>
    %28 = vector.broadcast %27 : vector<1x8xf32> to vector<16x8xf32>
    %29 = vector.shape_cast %24 : vector<1x8xf32> to vector<1x8xf32>
    %30 = vector.broadcast %29 : vector<1x8xf32> to vector<16x8xf32>
    %31 = arith.select %26, %28, %30 : vector<16x8xi1>, vector<16x8xf32>
    %32 = arith.mulf %12, %31 : vector<16x8xf32>
    %33 = vector.shape_cast %16 : vector<16x8xf32> to vector<16x1x8xf32>
    %34 = vector.shape_cast %12 : vector<16x8xf32> to vector<1x16x8xf32>
    %35 = vector.broadcast %33 : vector<16x1x8xf32> to vector<16x16x8xf32>
    %36 = vector.broadcast %34 : vector<1x16x8xf32> to vector<16x16x8xf32>
    %37 = arith.mulf %35, %36 : vector<16x16x8xf32>
    %38 = vector.shape_cast %32 : vector<16x8xf32> to vector<1x16x8xf32>
    %39 = vector.broadcast %38 : vector<1x16x8xf32> to vector<16x16x8xf32>
    %40 = arith.subf %37, %39 : vector<16x16x8xf32>
    %41 = math.exp %40 : vector<16x16x8xf32>
    %cst_4 = arith.constant dense<0.000000e+00> : vector<16x8xf32>
    %42 = vector.multi_reduction <add>, %41, %cst_4 [0] : vector<16x16x8xf32> to vector<16x8xf32>
    %43 = vector.shape_cast %20 : vector<16x8xf32> to vector<16x1x8xf32>
    %44 = vector.broadcast %43 : vector<16x1x8xf32> to vector<16x16x8xf32>
    %45 = arith.mulf %41, %44 : vector<16x16x8xf32>
    %cst_5 = arith.constant dense<0.000000e+00> : vector<16x8xf32>
    %46 = vector.multi_reduction <add>, %45, %cst_5 [0] : vector<16x16x8xf32> to vector<16x8xf32>
    %47 = tpu.reciprocal %42 {approx = true} : vector<16x8xf32> -> vector<16x8xf32>
    %48 = arith.mulf %42, %47 : vector<16x8xf32>
    %cst_6 = arith.constant 2.000000e+00 : f32
    %49 = vector.broadcast %cst_6 : f32 to vector<16x8xf32>
    %50 = arith.subf %49, %48 : vector<16x8xf32>
    %51 = arith.mulf %47, %50 : vector<16x8xf32>
    %52 = arith.mulf %46, %51 : vector<16x8xf32>
    %53 = vector.broadcast %7 : f32 to vector<16x8xf32>
    %54 = arith.mulf %52, %53 : vector<16x8xf32>
    %55 = vector.broadcast %8 : f32 to vector<16x8xf32>
    %56 = arith.addf %54, %55 : vector<16x8xf32>
    %c0_7 = arith.constant 0 : index
    %c0_8 = arith.constant 0 : index
    %57 = vector.load %arg3[%c0_7, %c0_8] : memref<1x16xf32, #tpu.memory_space<vmem>>, vector<1x16xf32>
    %cst_9 = arith.constant dense<0.000000e+00> : vector<1x8xf32>
    %58 = tpu.matmul %57, %56, %cst_9 {dimension_numbers = #tpu.dot_dimension_numbers<[1], [0], [0], [1], [0, 0, 1, 1], [], []>} : vector<1x16xf32>, vector<16x8xf32>, vector<1x8xf32> -> vector<1x8xf32>
    %c0_10 = arith.constant 0 : index
    %c0_11 = arith.constant 0 : index
    %59 = vector.load %arg4[%c0_10, %c0_11] : memref<1x1xf32, #tpu.memory_space<vmem>>, vector<1x1xf32>
    %60 = vector.broadcast %59 : vector<1x1xf32> to vector<1x8xf32>
    %61 = arith.addf %58, %60 : vector<1x8xf32>
    %c0_12 = arith.constant 0 : index
    %c0_13 = arith.constant 0 : index
    %62 = vector.load %arg5[%c0_12, %c0_13] : memref<1x8xf32, #tpu.memory_space<vmem>>, vector<1x8xf32>
    tpu.vector_store %arg5[%c0_12, %c0_13], %61 {strides = array<i32>} : memref<1x8xf32, #tpu.memory_space<vmem>>, vector<1x8xf32>,
    return
  }
  func.func @transform_0(%arg0: i32) -> (i32, i32) {
    %c0_i32 = arith.constant 0 : i32
    %c0_i32_0 = arith.constant 0 : i32
    return %c0_i32, %arg0 : i32, i32
  }
  func.func @transform_1(%arg0: i32) -> i32 {
    %c0_i32 = arith.constant 0 : i32
    %c0_i32_0 = arith.constant 0 : i32
    return %c0_i32 : i32
  }
  func.func @transform_2(%arg0: i32) -> (i32, i32) {
    %c0_i32 = arith.constant 0 : i32
    %c0_i32_0 = arith.constant 0 : i32
    %c0_i32_1 = arith.constant 0 : i32
    return %c0_i32, %c0_i32_0 : i32, i32
  }
  func.func @transform_3(%arg0: i32) -> (i32, i32) {
    %c0_i32 = arith.constant 0 : i32
    %c0_i32_0 = arith.constant 0 : i32
    %c0_i32_1 = arith.constant 0 : i32
    return %c0_i32, %c0_i32_0 : i32, i32
  }
  func.func @transform_4(%arg0: i32) -> (i32, i32) {
    %c0_i32 = arith.constant 0 : i32
    %c0_i32_0 = arith.constant 0 : i32
    return %c0_i32, %arg0 : i32, i32
  }
}

</mosaic_0001>

<llo_original>
// kernel: lstmrnn_forward.1
$region0: #{lstmrnn_forward.1}
  #allocation0 [shape = 'u32[]', space=smem, size = 0x4, offset = 0x4, fixed_abs, tag = 'smem constant byte address 0x4 - core index']
  #allocation1 [shape = 'u32[144,128]{1,0:T(1,128)}', space=vmem, size = 0x12000, scoped, tag = 'internal scratch']
  #allocation2 [shape = 'f32[1,1]{1,0:T(1,128)S(1)}', space=vmem, size = 0x200, scoped, tag = 'scoped memory for lstmrnn_forward.1']
  %s0 = inlined_call_operand.vmem [shape: f32[16,8], index: 0, kind: input, shape index: {}]
  %s1 = inlined_call_operand.vmem [shape: f32[8], index: 1, kind: input, shape index: {}]
  %s2 = inlined_call_operand.vmem [shape: f32[1,16], index: 2, kind: input, shape index: {}]
  %s3 = inlined_call_operand.<no memory space> [shape: f32[1,1], index: 3, kind: input, shape index: {}]
  %s4 = inlined_call_operand.hbm [shape: f32[1,8], index: 4, kind: output, shape index: {}]
  %s5 = sld [smem:[#allocation0]]
  $region30: #{lstmrnn_forward.1} parent=0
    _
  %s7 = ssub.s32 1, %s5
  %s8 = scalar_select 0, %s7, %s5
  %v9 = vstv %s3
  %10 = vst [vmem:[#allocation2] sm:$0x1] %v9
  $region1: #{lstmrnn_forward.1} parent=0
    #allocation3 [shape = 'u8[512]{0}', space=smem, size = 0x200, scoped, tag = 'input window, operand 1, single buffered']
    #allocation4 [shape = 's32[1]{0}', space=sflag, size = 0x4, scoped, tag = 'scoped memory for lstmrnn_forward.1']
    #allocation5 [shape = 's32[1]{0}', space=sflag, size = 0x4, scoped, tag = 'scoped memory for lstmrnn_forward.1']
    #allocation6 [shape = 'u8[512]{0}', space=vmem, size = 0x400, scoped, tag = 'output window, operand 0, single buffered']
    %11 = vsyncpa [#allocation5], 0
    %12 = vsyncpa [#allocation4], 0
    // Predicated region
    $region2: #{lstmrnn_forward.1} parent=1 // pred_check
      _
    $region3: #{lstmrnn_forward.1} parent=1 // pred_check_branch
      %14 = sbr.rel (0) target = $region5
    $region4: #{lstmrnn_forward.1} parent=1 // pred_region
      _
    $region5: #{lstmrnn_forward.1} parent=1 // pred_fallthru
      _
    // Predicated region
    $region6: #{lstmrnn_forward.1} parent=1 // pred_check
      _
    $region7: #{lstmrnn_forward.1} parent=1 // pred_check_branch
      %16 = sbr.rel (0) target = $region9
    $region8: #{lstmrnn_forward.1} parent=1 // pred_region
      %s18 = ssub.s32 16, 16
      %19 = vsyncadd [#allocation5], %s18
      %s21 = sshll.u32 %s1, 4
      %s22 = int_to_ptr.vmem [resolvable:$true] %s21
      %24 = dma.vmem_to_smem %s22, 16, [#allocation3], [#allocation5]
    $region9: #{lstmrnn_forward.1} parent=1 // pred_fallthru
      _
    // Predicated region
    $region10: #{lstmrnn_forward.1} parent=1 // pred_check
      _
    $region11: #{lstmrnn_forward.1} parent=1 // pred_check_branch
      %26 = sbr.rel (0) target = $region13
    $region12: #{lstmrnn_forward.1} parent=1 // pred_region
      _
    $region13: #{lstmrnn_forward.1} parent=1 // pred_fallthru
      _
    // Predicated region
    $region14: #{lstmrnn_forward.1} parent=1 // pred_check
      _
    $region15: #{lstmrnn_forward.1} parent=1 // pred_check_branch
      %28 = sbr.rel (0) target = $region17
    $region16: #{lstmrnn_forward.1} parent=1 // pred_region
      _
    $region17: #{lstmrnn_forward.1} parent=1 // pred_fallthru
      _
    // Predicated region
    $region18: #{lstmrnn_forward.1} parent=1 // pred_check
      _
    $region19: #{lstmrnn_forward.1} parent=1 // pred_check_branch
      %30 = sbr.rel (0) target = $region21
    $region20: #{lstmrnn_forward.1} parent=1 // pred_region
      %31 = dma.done [#allocation5], 16
    $region21: #{lstmrnn_forward.1} parent=1 // pred_fallthru
      _
    %32 = sfence
    %v33 = vld [vmem:[%s0] sm:$0xff]
    %v34 = vld [vmem:[%s0 + $0x8] sm:$0xff]
    %s35 = sld [smem:[#allocation3]]
    %s36 = sld [smem:[#allocation3 + $0x1]]
    %s37 = sld [smem:[#allocation3 + $0x2]]
    %s38 = sld [smem:[#allocation3 + $0x3]]
    %s39 = sld [smem:[#allocation3 + $0x4]]
    %s40 = sld [smem:[#allocation3 + $0x5]]
    %s41 = sld [smem:[#allocation3 + $0x6]]
    %s42 = sld [smem:[#allocation3 + $0x7]]
    %v43 = vstv %s35
    %v44 = vmul.f32 %v33, %v43
    %v45 = vmul.f32 %v34, %v43
    %v46 = vstv %s36
    %v47 = vadd.f32 %v44, %v46
    %v48 = vadd.f32 %v45, %v46
    %v49 = vstv %s37
    %v50 = vmul.f32 %v33, %v49
    %v51 = vmul.f32 %v34, %v49
    %v52 = vstv %s38
    %v53 = vadd.f32 %v50, %v52
    %v54 = vadd.f32 %v51, %v52
    %v55 = vstv %s39
    %v56 = vmul.f32 %v33, %v55
    %v57 = vmul.f32 %v34, %v55
    %v58 = vstv %s40
    %v59 = vadd.f32 %v56, %v58
    %v60 = vadd.f32 %v57, %v58
    %vm61 = vcmask 64512
    %v62 = vsel %vm61, %v53, -inf
    %v63 = vsel %vm61, %v54, -inf
    %v64 = vmax.f32 %v62, %v63
    %v65 = vrot.slane %v64, 4
    %v66 = vmax.f32 %v64, %v65
    %v67 = vrot.slane %v66, 2
    %v68 = vmax.f32 %v66, %v67
    %v69 = vrot.slane %v68, 1
    %v70 = vmax.f32 %v68, %v69
    %v71 = vsel %vm61, %v53, inf
    %v72 = vsel %vm61, %v54, inf
    %v73 = vmin.f32 %v71, %v72
    %v74 = vrot.slane %v73, 4
    %v75 = vmin.f32 %v73, %v74
    %v76 = vrot.slane %v75, 2
    %v77 = vmin.f32 %v75, %v76
    %v78 = vrot.slane %v77, 1
    %v79 = vmin.f32 %v77, %v78
    %vm80 = vcmp.ge.f32.partialorder %v47, 0.0
    %vm81 = vcmp.ge.f32.partialorder %v48, 0.0
    %v82 = vsel %vm80, %v70, %v79
    %v83 = vsel %vm81, %v70, %v79
    %v84 = vmul.f32 %v47, %v82
    %v85 = vmul.f32 %v48, %v83
    %v88 = vcombine.high %v53, %v53
    %v90 = vunpack.c.l.s4 1966171168
    %v91 = vunpack.c.0.s8 %v90
    %v92 = vlaneseq
    %v93 = vshrl.u32 %v92, 7
    %v94 = vsub.s32 %v91, %v93
    %v95 = vrot.slane %v53, %v94
    %v97 = vunpack.c.l.s4 1966171168
    %v98 = vunpack.c.0.s8 %v97
    %v99 = vlaneseq
    %v100 = vshrl.u32 %v99, 7
    %v101 = vsub.s32 %v98, %v100
    %v102 = vrot.slane %v88, %v101
    %v103 = vcombine.high %v95, %v95
    %v104 = vcombine.high %v102, %v102
    %v106 = vunpack.c.l.s4 1966171168
    %v107 = vunpack.c.0.s8 %v106
    %v108 = vlaneseq
    %v109 = vshrl.u32 %v108, 7
    %v110 = vsub.s32 %v107, %v109
    %v111 = vrot.slane %v95, %v110
    %v113 = vunpack.c.l.s4 1966171168
    %v114 = vunpack.c.0.s8 %v113
    %v115 = vlaneseq
    %v116 = vshrl.u32 %v115, 7
    %v117 = vsub.s32 %v114, %v116
    %v118 = vrot.slane %v102, %v117
    %v120 = vunpack.c.l.s4 1966171168
    %v121 = vunpack.c.0.s8 %v120
    %v122 = vlaneseq
    %v123 = vshrl.u32 %v122, 7
    %v124 = vsub.s32 %v121, %v123
    %v125 = vrot.slane %v103, %v124
    %v127 = vunpack.c.l.s4 1966171168
    %v128 = vunpack.c.0.s8 %v127
    %v129 = vlaneseq
    %v130 = vshrl.u32 %v129, 7
    %v131 = vsub.s32 %v128, %v130
    %v132 = vrot.slane %v104, %v131
    %v133 = vcombine.high %v111, %v111
    %v134 = vcombine.high %v118, %v118
    %v135 = vcombine.high %v125, %v125
    %v136 = vcombine.high %v132, %v132
    %v137 = vcombine.high %v54, %v54
    %v139 = vunpack.c.l.s4 1966171168
    %v140 = vunpack.c.0.s8 %v139
    %v141 = vlaneseq
    %v142 = vshrl.u32 %v141, 7
    %v143 = vsub.s32 %v140, %v142
    %v144 = vrot.slane %v54, %v143
    %v146 = vunpack.c.l.s4 1966171168
    %v147 = vunpack.c.0.s8 %v146
    %v148 = vlaneseq
    %v149 = vshrl.u32 %v148, 7
    %v150 = vsub.s32 %v147, %v149
    %v151 = vrot.slane %v137, %v150
    %v152 = vcombine.high %v144, %v144
    %v153 = vcombine.high %v151, %v151
    %v155 = vunpack.c.l.s4 1966171168
    %v156 = vunpack.c.0.s8 %v155
    %v157 = vlaneseq
    %v158 = vshrl.u32 %v157, 7
    %v159 = vsub.s32 %v156, %v158
    %v160 = vrot.slane %v144, %v159
    %v162 = vunpack.c.l.s4 1966171168
    %v163 = vunpack.c.0.s8 %v162
    %v164 = vlaneseq
    %v165 = vshrl.u32 %v164, 7
    %v166 = vsub.s32 %v163, %v165
    %v167 = vrot.slane %v151, %v166
    %v169 = vunpack.c.l.s4 1966171168
    %v170 = vunpack.c.0.s8 %v169
    %v171 = vlaneseq
    %v172 = vshrl.u32 %v171, 7
    %v173 = vsub.s32 %v170, %v172
    %v174 = vrot.slane %v152, %v173
    %v176 = vunpack.c.l.s4 1966171168
    %v177 = vunpack.c.0.s8 %v176
    %v178 = vlaneseq
    %v179 = vshrl.u32 %v178, 7
    %v180 = vsub.s32 %v177, %v179
    %v181 = vrot.slane %v153, %v180
    %v182 = vcombine.high %v160, %v160
    %v183 = vcombine.high %v167, %v167
    %v184 = vcombine.high %v174, %v174
    %v185 = vcombine.high %v181, %v181
    %v186 = vlaneseq
    %v187 = vshrl.u32 %v186, 7
    %v188 = vsub.s32 0, %v187
    %v189 = vrot.slane %v111, %v188
    %v190 = vlaneseq
    %v191 = vshrl.u32 %v190, 7
    %v192 = vsub.s32 0, %v191
    %v193 = vrot.slane %v125, %v192
    %v194 = vlaneseq
    %v195 = vshrl.u32 %v194, 7
    %v196 = vsub.s32 0, %v195
    %v197 = vrot.slane %v133, %v196
    %v198 = vlaneseq
    %v199 = vshrl.u32 %v198, 7
    %v200 = vsub.s32 0, %v199
    %v201 = vrot.slane %v135, %v200
    %v202 = vlaneseq
    %v203 = vshrl.u32 %v202, 7
    %v204 = vsub.s32 0, %v203
    %v205 = vrot.slane %v118, %v204
    %v206 = vlaneseq
    %v207 = vshrl.u32 %v206, 7
    %v208 = vsub.s32 0, %v207
    %v209 = vrot.slane %v132, %v208
    %v210 = vlaneseq
    %v211 = vshrl.u32 %v210, 7
    %v212 = vsub.s32 0, %v211
    %v213 = vrot.slane %v134, %v212
    %v214 = vlaneseq
    %v215 = vshrl.u32 %v214, 7
    %v216 = vsub.s32 0, %v215
    %v217 = vrot.slane %v136, %v216
    %v218 = vlaneseq
    %v219 = vshrl.u32 %v218, 7
    %v220 = vsub.s32 0, %v219
    %v221 = vrot.slane %v160, %v220
    %v222 = vlaneseq
    %v223 = vshrl.u32 %v222, 7
    %v224 = vsub.s32 0, %v223
    %v225 = vrot.slane %v174, %v224
    %v226 = vlaneseq
    %v227 = vshrl.u32 %v226, 7
    %v228 = vsub.s32 0, %v227
    %v229 = vrot.slane %v182, %v228
    %v230 = vlaneseq
    %v231 = vshrl.u32 %v230, 7
    %v232 = vsub.s32 0, %v231
    %v233 = vrot.slane %v184, %v232
    %v234 = vlaneseq
    %v235 = vshrl.u32 %v234, 7
    %v236 = vsub.s32 0, %v235
    %v237 = vrot.slane %v167, %v236
    %v238 = vlaneseq
    %v239 = vshrl.u32 %v238, 7
    %v240 = vsub.s32 0, %v239
    %v241 = vrot.slane %v181, %v240
    %v242 = vlaneseq
    %v243 = vshrl.u32 %v242, 7
    %v244 = vsub.s32 0, %v243
    %v245 = vrot.slane %v183, %v244
    %v246 = vlaneseq
    %v247 = vshrl.u32 %v246, 7
    %v248 = vsub.s32 0, %v247
    %v249 = vrot.slane %v185, %v248
    %v266 = vmul.f32 %v189, %v47
    %v267 = vmul.f32 %v189, %v48
    %v268 = vmul.f32 %v193, %v47
    %v269 = vmul.f32 %v193, %v48
    %v270 = vmul.f32 %v197, %v47
    %v271 = vmul.f32 %v197, %v48
    %v272 = vmul.f32 %v201, %v47
    %v273 = vmul.f32 %v201, %v48
    %v274 = vmul.f32 %v205, %v47
    %v275 = vmul.f32 %v205, %v48
    %v276 = vmul.f32 %v209, %v47
    %v277 = vmul.f32 %v209, %v48
    %v278 = vmul.f32 %v213, %v47
    %v279 = vmul.f32 %v213, %v48
    %v280 = vmul.f32 %v217, %v47
    %v281 = vmul.f32 %v217, %v48
    %v282 = vmul.f32 %v221, %v47
    %v283 = vmul.f32 %v221, %v48
    %v284 = vmul.f32 %v225, %v47
    %v285 = vmul.f32 %v225, %v48
    %v286 = vmul.f32 %v229, %v47
    %v287 = vmul.f32 %v229, %v48
    %v288 = vmul.f32 %v233, %v47
    %v289 = vmul.f32 %v233, %v48
    %v290 = vmul.f32 %v237, %v47
    %v291 = vmul.f32 %v237, %v48
    %v292 = vmul.f32 %v241, %v47
    %v293 = vmul.f32 %v241, %v48
    %v294 = vmul.f32 %v245, %v47
    %v295 = vmul.f32 %v245, %v48
    %v296 = vmul.f32 %v249, %v47
    %v297 = vmul.f32 %v249, %v48
    %v298 = vsub.f32 %v266, %v84
    %v299 = vsub.f32 %v267, %v85
    %v300 = vsub.f32 %v268, %v84
    %v301 = vsub.f32 %v269, %v85
    %v302 = vsub.f32 %v270, %v84
    %v303 = vsub.f32 %v271, %v85
    %v304 = vsub.f32 %v272, %v84
    %v305 = vsub.f32 %v273, %v85
    %v306 = vsub.f32 %v274, %v84
    %v307 = vsub.f32 %v275, %v85
    %v308 = vsub.f32 %v276, %v84
    %v309 = vsub.f32 %v277, %v85
    %v310 = vsub.f32 %v278, %v84
    %v311 = vsub.f32 %v279, %v85
    %v312 = vsub.f32 %v280, %v84
    %v313 = vsub.f32 %v281, %v85
    %v314 = vsub.f32 %v282, %v84
    %v315 = vsub.f32 %v283, %v85
    %v316 = vsub.f32 %v284, %v84
    %v317 = vsub.f32 %v285, %v85
    %v318 = vsub.f32 %v286, %v84
    %v319 = vsub.f32 %v287, %v85
    %v320 = vsub.f32 %v288, %v84
    %v321 = vsub.f32 %v289, %v85
    %v322 = vsub.f32 %v290, %v84
    %v323 = vsub.f32 %v291, %v85
    %v324 = vsub.f32 %v292, %v84
    %v325 = vsub.f32 %v293, %v85
    %v326 = vsub.f32 %v294, %v84
    %v327 = vsub.f32 %v295, %v85
    %v328 = vsub.f32 %v296, %v84
    %v329 = vsub.f32 %v297, %v85
    %v330 = vmul.f32 %v298, 1.442695
    %v331 = vpow.pop %v330
    %v332 = vmul.f32 %v299, 1.442695
    %v333 = vpow.pop %v332
    %v334 = vmul.f32 %v300, 1.442695
    %v335 = vpow.pop %v334
    %v336 = vmul.f32 %v301, 1.442695
    %v337 = vpow.pop %v336
    %v338 = vmul.f32 %v302, 1.442695
    %v339 = vpow.pop %v338
    %v340 = vmul.f32 %v303, 1.442695
    %v341 = vpow.pop %v340
    %v342 = vmul.f32 %v304, 1.442695
    %v343 = vpow.pop %v342
    %v344 = vmul.f32 %v305, 1.442695
    %v345 = vpow.pop %v344
    %v346 = vmul.f32 %v306, 1.442695
    %v347 = vpow.pop %v346
    %v348 = vmul.f32 %v307, 1.442695
    %v349 = vpow.pop %v348
    %v350 = vmul.f32 %v308, 1.442695
    %v351 = vpow.pop %v350
    %v352 = vmul.f32 %v309, 1.442695
    %v353 = vpow.pop %v352
    %v354 = vmul.f32 %v310, 1.442695
    %v355 = vpow.pop %v354
    %v356 = vmul.f32 %v311, 1.442695
    %v357 = vpow.pop %v356
    %v358 = vmul.f32 %v312, 1.442695
    %v359 = vpow.pop %v358
    %v360 = vmul.f32 %v313, 1.442695
    %v361 = vpow.pop %v360
    %v362 = vmul.f32 %v314, 1.442695
    %v363 = vpow.pop %v362
    %v364 = vmul.f32 %v315, 1.442695
    %v365 = vpow.pop %v364
    %v366 = vmul.f32 %v316, 1.442695
    %v367 = vpow.pop %v366
    %v368 = vmul.f32 %v317, 1.442695
    %v369 = vpow.pop %v368
    %v370 = vmul.f32 %v318, 1.442695
    %v371 = vpow.pop %v370
    %v372 = vmul.f32 %v319, 1.442695
    %v373 = vpow.pop %v372
    %v374 = vmul.f32 %v320, 1.442695
    %v375 = vpow.pop %v374
    %v376 = vmul.f32 %v321, 1.442695
    %v377 = vpow.pop %v376
    %v378 = vmul.f32 %v322, 1.442695
    %v379 = vpow.pop %v378
    %v380 = vmul.f32 %v323, 1.442695
    %v381 = vpow.pop %v380
    %v382 = vmul.f32 %v324, 1.442695
    %v383 = vpow.pop %v382
    %v384 = vmul.f32 %v325, 1.442695
    %v385 = vpow.pop %v384
    %v386 = vmul.f32 %v326, 1.442695
    %v387 = vpow.pop %v386
    %v388 = vmul.f32 %v327, 1.442695
    %v389 = vpow.pop %v388
    %v390 = vmul.f32 %v328, 1.442695
    %v391 = vpow.pop %v390
    %v392 = vmul.f32 %v329, 1.442695
    %v393 = vpow.pop %v392
    %v394 = vsel %vm61, %v331, 0.0
    %v395 = vsel %vm61, %v335, 0.0
    %v396 = vadd.f32 %v394, %v395
    %v397 = vsel %vm61, %v339, 0.0
    %v398 = vadd.f32 %v396, %v397
    %v399 = vsel %vm61, %v343, 0.0
    %v400 = vadd.f32 %v398, %v399
    %v401 = vsel %vm61, %v347, 0.0
    %v402 = vadd.f32 %v400, %v401
    %v403 = vsel %vm61, %v351, 0.0
    %v404 = vadd.f32 %v402, %v403
    %v405 = vsel %vm61, %v355, 0.0
    %v406 = vadd.f32 %v404, %v405
    %v407 = vsel %vm61, %v359, 0.0
    %v408 = vadd.f32 %v406, %v407
    %v409 = vsel %vm61, %v363, 0.0
    %v410 = vadd.f32 %v408, %v409
    %v411 = vsel %vm61, %v367, 0.0
    %v412 = vadd.f32 %v410, %v411
    %v413 = vsel %vm61, %v371, 0.0
    %v414 = vadd.f32 %v412, %v413
    %v415 = vsel %vm61, %v375, 0.0
    %v416 = vadd.f32 %v414, %v415
    %v417 = vsel %vm61, %v379, 0.0
    %v418 = vadd.f32 %v416, %v417
    %v419 = vsel %vm61, %v383, 0.0
    %v420 = vadd.f32 %v418, %v419
    %v421 = vsel %vm61, %v387, 0.0
    %v422 = vadd.f32 %v420, %v421
    %v423 = vsel %vm61, %v391, 0.0
    %v424 = vadd.f32 %v422, %v423
    %v425 = vsel %vm61, %v333, 0.0
    %v426 = vsel %vm61, %v337, 0.0
    %v427 = vadd.f32 %v425, %v426
    %v428 = vsel %vm61, %v341, 0.0
    %v429 = vadd.f32 %v427, %v428
    %v430 = vsel %vm61, %v345, 0.0
    %v431 = vadd.f32 %v429, %v430
    %v432 = vsel %vm61, %v349, 0.0
    %v433 = vadd.f32 %v431, %v432
    %v434 = vsel %vm61, %v353, 0.0
    %v435 = vadd.f32 %v433, %v434
    %v436 = vsel %vm61, %v357, 0.0
    %v437 = vadd.f32 %v435, %v436
    %v438 = vsel %vm61, %v361, 0.0
    %v439 = vadd.f32 %v437, %v438
    %v440 = vsel %vm61, %v365, 0.0
    %v441 = vadd.f32 %v439, %v440
    %v442 = vsel %vm61, %v369, 0.0
    %v443 = vadd.f32 %v441, %v442
    %v444 = vsel %vm61, %v373, 0.0
    %v445 = vadd.f32 %v443, %v444
    %v446 = vsel %vm61, %v377, 0.0
    %v447 = vadd.f32 %v445, %v446
    %v448 = vsel %vm61, %v381, 0.0
    %v449 = vadd.f32 %v447, %v448
    %v450 = vsel %vm61, %v385, 0.0
    %v451 = vadd.f32 %v449, %v450
    %v452 = vsel %vm61, %v389, 0.0
    %v453 = vadd.f32 %v451, %v452
    %v454 = vsel %vm61, %v393, 0.0
    %v455 = vadd.f32 %v453, %v454
    %v458 = vcombine.high %v59, %v59
    %v460 = vunpack.c.l.s4 1966171168
    %v461 = vunpack.c.0.s8 %v460
    %v462 = vlaneseq
    %v463 = vshrl.u32 %v462, 7
    %v464 = vsub.s32 %v461, %v463
    %v465 = vrot.slane %v59, %v464
    %v467 = vunpack.c.l.s4 1966171168
    %v468 = vunpack.c.0.s8 %v467
    %v469 = vlaneseq
    %v470 = vshrl.u32 %v469, 7
    %v471 = vsub.s32 %v468, %v470
    %v472 = vrot.slane %v458, %v471
    %v473 = vcombine.high %v465, %v465
    %v474 = vcombine.high %v472, %v472
    %v476 = vunpack.c.l.s4 1966171168
    %v477 = vunpack.c.0.s8 %v476
    %v478 = vlaneseq
    %v479 = vshrl.u32 %v478, 7
    %v480 = vsub.s32 %v477, %v479
    %v481 = vrot.slane %v465, %v480
    %v483 = vunpack.c.l.s4 1966171168
    %v484 = vunpack.c.0.s8 %v483
    %v485 = vlaneseq
    %v486 = vshrl.u32 %v485, 7
    %v487 = vsub.s32 %v484, %v486
    %v488 = vrot.slane %v472, %v487
    %v490 = vunpack.c.l.s4 1966171168
    %v491 = vunpack.c.0.s8 %v490
    %v492 = vlaneseq
    %v493 = vshrl.u32 %v492, 7
    %v494 = vsub.s32 %v491, %v493
    %v495 = vrot.slane %v473, %v494
    %v497 = vunpack.c.l.s4 1966171168
    %v498 = vunpack.c.0.s8 %v497
    %v499 = vlaneseq
    %v500 = vshrl.u32 %v499, 7
    %v501 = vsub.s32 %v498, %v500
    %v502 = vrot.slane %v474, %v501
    %v503 = vcombine.high %v481, %v481
    %v504 = vcombine.high %v488, %v488
    %v505 = vcombine.high %v495, %v495
    %v506 = vcombine.high %v502, %v502
    %v507 = vcombine.high %v60, %v60
    %v509 = vunpack.c.l.s4 1966171168
    %v510 = vunpack.c.0.s8 %v509
    %v511 = vlaneseq
    %v512 = vshrl.u32 %v511, 7
    %v513 = vsub.s32 %v510, %v512
    %v514 = vrot.slane %v60, %v513
    %v516 = vunpack.c.l.s4 1966171168
    %v517 = vunpack.c.0.s8 %v516
    %v518 = vlaneseq
    %v519 = vshrl.u32 %v518, 7
    %v520 = vsub.s32 %v517, %v519
    %v521 = vrot.slane %v507, %v520
    %v522 = vcombine.high %v514, %v514
    %v523 = vcombine.high %v521, %v521
    %v525 = vunpack.c.l.s4 1966171168
    %v526 = vunpack.c.0.s8 %v525
    %v527 = vlaneseq
    %v528 = vshrl.u32 %v527, 7
    %v529 = vsub.s32 %v526, %v528
    %v530 = vrot.slane %v514, %v529
    %v532 = vunpack.c.l.s4 1966171168
    %v533 = vunpack.c.0.s8 %v532
    %v534 = vlaneseq
    %v535 = vshrl.u32 %v534, 7
    %v536 = vsub.s32 %v533, %v535
    %v537 = vrot.slane %v521, %v536
    %v539 = vunpack.c.l.s4 1966171168
    %v540 = vunpack.c.0.s8 %v539
    %v541 = vlaneseq
    %v542 = vshrl.u32 %v541, 7
    %v543 = vsub.s32 %v540, %v542
    %v544 = vrot.slane %v522, %v543
    %v546 = vunpack.c.l.s4 1966171168
    %v547 = vunpack.c.0.s8 %v546
    %v548 = vlaneseq
    %v549 = vshrl.u32 %v548, 7
    %v550 = vsub.s32 %v547, %v549
    %v551 = vrot.slane %v523, %v550
    %v552 = vcombine.high %v530, %v530
    %v553 = vcombine.high %v537, %v537
    %v554 = vcombine.high %v544, %v544
    %v555 = vcombine.high %v551, %v551
    %v556 = vlaneseq
    %v557 = vshrl.u32 %v556, 7
    %v558 = vsub.s32 0, %v557
    %v559 = vrot.slane %v481, %v558
    %v560 = vlaneseq
    %v561 = vshrl.u32 %v560, 7
    %v562 = vsub.s32 0, %v561
    %v563 = vrot.slane %v495, %v562
    %v564 = vlaneseq
    %v565 = vshrl.u32 %v564, 7
    %v566 = vsub.s32 0, %v565
    %v567 = vrot.slane %v503, %v566
    %v568 = vlaneseq
    %v569 = vshrl.u32 %v568, 7
    %v570 = vsub.s32 0, %v569
    %v571 = vrot.slane %v505, %v570
    %v572 = vlaneseq
    %v573 = vshrl.u32 %v572, 7
    %v574 = vsub.s32 0, %v573
    %v575 = vrot.slane %v488, %v574
    %v576 = vlaneseq
    %v577 = vshrl.u32 %v576, 7
    %v578 = vsub.s32 0, %v577
    %v579 = vrot.slane %v502, %v578
    %v580 = vlaneseq
    %v581 = vshrl.u32 %v580, 7
    %v582 = vsub.s32 0, %v581
    %v583 = vrot.slane %v504, %v582
    %v584 = vlaneseq
    %v585 = vshrl.u32 %v584, 7
    %v586 = vsub.s32 0, %v585
    %v587 = vrot.slane %v506, %v586
    %v588 = vlaneseq
    %v589 = vshrl.u32 %v588, 7
    %v590 = vsub.s32 0, %v589
    %v591 = vrot.slane %v530, %v590
    %v592 = vlaneseq
    %v593 = vshrl.u32 %v592, 7
    %v594 = vsub.s32 0, %v593
    %v595 = vrot.slane %v544, %v594
    %v596 = vlaneseq
    %v597 = vshrl.u32 %v596, 7
    %v598 = vsub.s32 0, %v597
    %v599 = vrot.slane %v552, %v598
    %v600 = vlaneseq
    %v601 = vshrl.u32 %v600, 7
    %v602 = vsub.s32 0, %v601
    %v603 = vrot.slane %v554, %v602
    %v604 = vlaneseq
    %v605 = vshrl.u32 %v604, 7
    %v606 = vsub.s32 0, %v605
    %v607 = vrot.slane %v537, %v606
    %v608 = vlaneseq
    %v609 = vshrl.u32 %v608, 7
    %v610 = vsub.s32 0, %v609
    %v611 = vrot.slane %v551, %v610
    %v612 = vlaneseq
    %v613 = vshrl.u32 %v612, 7
    %v614 = vsub.s32 0, %v613
    %v615 = vrot.slane %v553, %v614
    %v616 = vlaneseq
    %v617 = vshrl.u32 %v616, 7
    %v618 = vsub.s32 0, %v617
    %v619 = vrot.slane %v555, %v618
    %v636 = vmul.f32 %v331, %v559
    %v637 = vmul.f32 %v333, %v559
    %v638 = vmul.f32 %v335, %v563
    %v639 = vmul.f32 %v337, %v563
    %v640 = vmul.f32 %v339, %v567
    %v641 = vmul.f32 %v341, %v567
    %v642 = vmul.f32 %v343, %v571
    %v643 = vmul.f32 %v345, %v571
    %v644 = vmul.f32 %v347, %v575
    %v645 = vmul.f32 %v349, %v575
    %v646 = vmul.f32 %v351, %v579
    %v647 = vmul.f32 %v353, %v579
    %v648 = vmul.f32 %v355, %v583
    %v649 = vmul.f32 %v357, %v583
    %v650 = vmul.f32 %v359, %v587
    %v651 = vmul.f32 %v361, %v587
    %v652 = vmul.f32 %v363, %v591
    %v653 = vmul.f32 %v365, %v591
    %v654 = vmul.f32 %v367, %v595
    %v655 = vmul.f32 %v369, %v595
    %v656 = vmul.f32 %v371, %v599
    %v657 = vmul.f32 %v373, %v599
    %v658 = vmul.f32 %v375, %v603
    %v659 = vmul.f32 %v377, %v603
    %v660 = vmul.f32 %v379, %v607
    %v661 = vmul.f32 %v381, %v607
    %v662 = vmul.f32 %v383, %v611
    %v663 = vmul.f32 %v385, %v611
    %v664 = vmul.f32 %v387, %v615
    %v665 = vmul.f32 %v389, %v615
    %v666 = vmul.f32 %v391, %v619
    %v667 = vmul.f32 %v393, %v619
    %v668 = vsel %vm61, %v636, 0.0
    %v669 = vsel %vm61, %v638, 0.0
    %v670 = vadd.f32 %v668, %v669
    %v671 = vsel %vm61, %v640, 0.0
    %v672 = vadd.f32 %v670, %v671
    %v673 = vsel %vm61, %v642, 0.0
    %v674 = vadd.f32 %v672, %v673
    %v675 = vsel %vm61, %v644, 0.0
    %v676 = vadd.f32 %v674, %v675
    %v677 = vsel %vm61, %v646, 0.0
    %v678 = vadd.f32 %v676, %v677
    %v679 = vsel %vm61, %v648, 0.0
    %v680 = vadd.f32 %v678, %v679
    %v681 = vsel %vm61, %v650, 0.0
    %v682 = vadd.f32 %v680, %v681
    %v683 = vsel %vm61, %v652, 0.0
    %v684 = vadd.f32 %v682, %v683
    %v685 = vsel %vm61, %v654, 0.0
    %v686 = vadd.f32 %v684, %v685
    %v687 = vsel %vm61, %v656, 0.0
    %v688 = vadd.f32 %v686, %v687
    %v689 = vsel %vm61, %v658, 0.0
    %v690 = vadd.f32 %v688, %v689
    %v691 = vsel %vm61, %v660, 0.0
    %v692 = vadd.f32 %v690, %v691
    %v693 = vsel %vm61, %v662, 0.0
    %v694 = vadd.f32 %v692, %v693
    %v695 = vsel %vm61, %v664, 0.0
    %v696 = vadd.f32 %v694, %v695
    %v697 = vsel %vm61, %v666, 0.0
    %v698 = vadd.f32 %v696, %v697
    %v699 = vsel %vm61, %v637, 0.0
    %v700 = vsel %vm61, %v639, 0.0
    %v701 = vadd.f32 %v699, %v700
    %v702 = vsel %vm61, %v641, 0.0
    %v703 = vadd.f32 %v701, %v702
    %v704 = vsel %vm61, %v643, 0.0
    %v705 = vadd.f32 %v703, %v704
    %v706 = vsel %vm61, %v645, 0.0
    %v707 = vadd.f32 %v705, %v706
    %v708 = vsel %vm61, %v647, 0.0
    %v709 = vadd.f32 %v707, %v708
    %v710 = vsel %vm61, %v649, 0.0
    %v711 = vadd.f32 %v709, %v710
    %v712 = vsel %vm61, %v651, 0.0
    %v713 = vadd.f32 %v711, %v712
    %v714 = vsel %vm61, %v653, 0.0
    %v715 = vadd.f32 %v713, %v714
    %v716 = vsel %vm61, %v655, 0.0
    %v717 = vadd.f32 %v715, %v716
    %v718 = vsel %vm61, %v657, 0.0
    %v719 = vadd.f32 %v717, %v718
    %v720 = vsel %vm61, %v659, 0.0
    %v721 = vadd.f32 %v719, %v720
    %v722 = vsel %vm61, %v661, 0.0
    %v723 = vadd.f32 %v721, %v722
    %v724 = vsel %vm61, %v663, 0.0
    %v725 = vadd.f32 %v723, %v724
    %v726 = vsel %vm61, %v665, 0.0
    %v727 = vadd.f32 %v725, %v726
    %v728 = vsel %vm61, %v667, 0.0
    %v729 = vadd.f32 %v727, %v728
    %v730 = vrcp.pop %v424
    %v731 = vrcp.pop %v455
    %v732 = vmul.f32 %v424, %v730
    %v733 = vmul.f32 %v455, %v731
    %v734 = vsub.f32 2.0, %v732
    %v735 = vsub.f32 2.0, %v733
    %v736 = vmul.f32 %v730, %v734
    %v737 = vmul.f32 %v731, %v735
    %v738 = vmul.f32 %v698, %v736
    %v739 = vmul.f32 %v729, %v737
    %v740 = vstv %s41
    %v741 = vmul.f32 %v738, %v740
    %v742 = vmul.f32 %v739, %v740
    %v743 = vstv %s42
    %v744 = vadd.f32 %v741, %v743
    %v745 = vadd.f32 %v742, %v743
    %v746 = vld [vmem:[%s2] sm:$0x1]
    %v747 = vld [vmem:[#allocation2] sm:$0x1]
    %749 = vset.pattern.permute.xlu0 0
    %750 = vperm.xlu0 %749, %v747
    %v751 = vpop.permute.xlu0 %750
    %v753 = vlaneseq
    %v754 = vshrl.u32 %v753, 7
    %v755 = vsub.s32 0, %v754
    %v756 = vrot.slane %v751, %v755
    %vm757 = vcmask 130048
    %v759 = vsel %vm757, %v746, 0
    %761 = vmatprep.subr.mxu0 0.0
    %762 = vmatpush1.msra.mxu0 %v744
    %763 = vmatprep.subr.mxu0 0.0
    %764 = vmatpush1.msra.mxu0 %v745
    %765 = vmatprep.subr.mxu0 0.0
    %766 = vmatpush1.msra.mxu0 0.0
    %767 = vmatprep.subr.mxu0 0.0
    %768 = vmatpush1.msra.mxu0 0.0
    %769 = vmatprep.subr.mxu0 0.0
    %770 = vmatpush1.msra.mxu0 0.0
    %771 = vmatprep.subr.mxu0 0.0
    %772 = vmatpush1.msra.mxu0 0.0
    %773 = vmatprep.subr.mxu0 0.0
    %774 = vmatpush1.msra.mxu0 0.0
    %775 = vmatprep.subr.mxu0 0.0
    %776 = vmatpush1.msra.mxu0 0.0
    %777 = vmatprep.subr.mxu0 0.0
    %778 = vmatpush1.msra.mxu0 0.0
    %779 = vmatprep.subr.mxu0 0.0
    %780 = vmatpush1.msra.mxu0 0.0
    %781 = vmatprep.subr.mxu0 0.0
    %782 = vmatpush1.msra.mxu0 0.0
    %783 = vmatprep.subr.mxu0 0.0
    %784 = vmatpush1.msra.mxu0 0.0
    %785 = vmatprep.subr.mxu0 0.0
    %786 = vmatpush1.msra.mxu0 0.0
    %787 = vmatprep.subr.mxu0 0.0
    %788 = vmatpush1.msra.mxu0 0.0
    %789 = vmatprep.subr.mxu0 0.0
    %790 = vmatpush1.msra.mxu0 0.0
    %791 = vmatprep.subr.mxu0 0.0
    %792 = vmatpush1.msra.mxu0 0.0
    %793 = vmatprep.subr.mxu0 0.0
    %794 = vmatpush1.msra.mxu0 0.0
    %795 = vmatprep.subr.mxu0 0.0
    %796 = vmatpush1.msra.mxu0 0.0
    %797 = vmatprep.subr.mxu0 0.0
    %798 = vmatpush1.msra.mxu0 0.0
    %799 = vmatprep.subr.mxu0 0.0
    %800 = vmatpush1.msra.mxu0 0.0
    %801 = vmatprep.subr.mxu0 0.0
    %802 = vmatpush1.msra.mxu0 0.0
    %803 = vmatprep.subr.mxu0 0.0
    %804 = vmatpush1.msra.mxu0 0.0
    %805 = vmatprep.subr.mxu0 0.0
    %806 = vmatpush1.msra.mxu0 0.0
    %807 = vmatprep.subr.mxu0 0.0
    %808 = vmatpush1.msra.mxu0 0.0
    %809 = vmatprep.subr.mxu0 0.0
    %810 = vmatpush1.msra.mxu0 0.0
    %811 = vmatprep.subr.mxu0 0.0
    %812 = vmatpush1.msra.mxu0 0.0
    %813 = vmatprep.subr.mxu0 0.0
    %814 = vmatpush1.msra.mxu0 0.0
    %815 = vmatprep.subr.mxu0 0.0
    %816 = vmatpush1.msra.mxu0 0.0
    %817 = vmatprep.subr.mxu0 0.0
    %818 = vmatpush1.msra.mxu0 0.0
    %819 = vmatprep.subr.mxu0 0.0
    %820 = vmatpush1.msra.mxu0 0.0
    %821 = vmatprep.subr.mxu0 0.0
    %822 = vmatpush1.msra.mxu0 0.0
    %823 = vmatprep.subr.mxu0 0.0
    %824 = vmatpush1.msra.mxu0 0.0
    %825 = vmatprep.mubr.f32.mxu0 0.0
    %826 = vmatmul.mubr.f32.gmra.mrb[0].mxu0 %v759
    %v827 = vpop.f32.mrb[0].mxu0
    %v828 = vadd.f32 %v756, %v827
    %v829 = vpop.f32.mrb[0].mxu0
    %830 = vdwg.mxu0
    %vm831 = vcmask 57344
    %832 = vst.msk [vmem:[#allocation6] sm:$0x1] %vm831, %v828
    // Predicated region
    $region22: #{lstmrnn_forward.1} parent=1 // pred_check
      _
    $region23: #{lstmrnn_forward.1} parent=1 // pred_check_branch
      %834 = sbr.rel (0) target = $region25
    $region24: #{lstmrnn_forward.1} parent=1 // pred_region
      %s836 = ssub.s32 16, 16
      %837 = vsyncadd [#allocation4], %s836
      %s839 = sshll.u32 [#allocation6], 4
      %s840 = int_to_ptr.vmem [resolvable:$true] %s839
      %842 = dma.vmem_to_hbm [thread:$0]  %s840, 16, %s4, [#allocation4]
    $region25: #{lstmrnn_forward.1} parent=1 // pred_fallthru
      _
    // Predicated region
    $region26: #{lstmrnn_forward.1} parent=1 // pred_check
      _
    $region27: #{lstmrnn_forward.1} parent=1 // pred_check_branch
      %844 = sbr.rel (0) target = $region29
    $region28: #{lstmrnn_forward.1} parent=1 // pred_region
      %845 = dma.done [#allocation4], 16
    $region29: #{lstmrnn_forward.1} parent=1 // pred_fallthru
      _
    %846 = vsyncpa [#allocation4], 1
    %847 = vsyncpa [#allocation5], 1

</llo_original>
